<compile_context>
chip_gen: v6e
topology: v6e:2x2x1
jax: 0.10.0
libtpu: 0.0.40
codegen_flags: <defaults>
</compile_context>

<pallas_src>
import functools
import math

import jax
import jax.numpy as jnp
from jax import lax
from jax.experimental import pallas as pl
from jax.experimental.pallas import tpu as pltpu


def _self_attention_kernel(xq_ref, xk_ref, xv_ref, wq_ref, wk_ref, wv_ref,
                           out_ref, attn_ref, k_proj, v_proj,
                           *, mm_dtype, approx_recip):
    # Blocks (batch dim squeezed): xq (TQ, H); xk/xv (S, H); wq_t/wk_t/wv_t
    # (H, D); out (TQ, D); attn (TQ, S); scratch k_proj/v_proj (S, D).

    # K/V projections computed ONCE per batch (qi == 0) into VMEM scratch that
    # persists across query tiles (grid iterates qi fastest within each b).
    # Requires the qi grid axis to be "arbitrary".
    @pl.when(pl.program_id(1) == 0)
    def _():
        k_proj[...] = jnp.dot(
            xk_ref[...], wk_ref[...],
            preferred_element_type=jnp.float32).astype(mm_dtype)          # (S, D)
        v_proj[...] = jnp.dot(
            xv_ref[...], wv_ref[...],
            preferred_element_type=jnp.float32).astype(mm_dtype)          # (S, D)

    # Per query tile: q projection. 1/sqrt(D) is already folded into wq_t by
    # the wrapper, so there is no per-step scale multiply here.
    q = jnp.dot(xq_ref[...], wq_ref[...],
                preferred_element_type=jnp.float32).astype(mm_dtype)      # (TQ, D)

    # q @ k^T via dot_general contracting on D: no materialized transpose.
    s = lax.dot_general(q, k_proj[...],
                        dimension_numbers=(((1,), (1,)), ((), ())),
                        preferred_element_type=jnp.float32)               # (TQ, S)

    # Numerically-stable softmax in f32; the reciprocal goes to the EUP slot.
    m = jnp.max(s, axis=-1, keepdims=True)
    p = jnp.exp(s - m)
    denom = jnp.sum(p, axis=-1, keepdims=True)
    attn = p * pl.reciprocal(denom, approx=approx_recip)                  # (TQ, S)

    attn_ref[...] = attn.astype(attn_ref.dtype)

    # weighted_v = attn @ v (MXU in mm_dtype, f32 accumulation).
    out = jnp.dot(attn.astype(mm_dtype), v_proj[...],
                  preferred_element_type=jnp.float32)                     # (TQ, D)
    out_ref[...] = out.astype(out_ref.dtype)


def _vmem_budget_bytes():
    """Per-generation scoped-VMEM budget: 64 MiB on v5e/v6e (128 MiB physical),
    ~48 MiB on v7x (64 MiB physical)."""
    try:
        cap = int(pltpu.get_tpu_info().vmem_capacity_bytes)
    except Exception:
        cap = 128 * 1024 * 1024
    return min(64 * 1024 * 1024, (cap * 3) // 4)


def self_attention(query, key, value, wq, wk, wv, *,
                   matmul_dtype=jnp.bfloat16, attn_dtype=None, q_block=256):
    """query/key/value: [B, S, H]; wq/wk/wv: [D, H] (nn.Linear layout).

    Returns (weighted_v [B, S, D] in query.dtype,
             attention_score [B, S, S] in attn_dtype (default = matmul_dtype)).
    matmul_dtype: dtype fed to the MXU (bf16 default, f32 accumulation).
    """
    B, S, H = query.shape
    D = wq.shape[0]
    scale = 1.0 / math.sqrt(float(D))

    mm_dtype = jnp.dtype(matmul_dtype) if matmul_dtype is not None else jnp.dtype(query.dtype)
    attn_dt = jnp.dtype(attn_dtype) if attn_dtype is not None else mm_dtype
    out_dtype = query.dtype

    # One-time wrapper-side prep (outside the grid loop):
    #  * transpose nn.Linear weights -> (H, D) so the kernel never transposes,
    #  * fold 1/sqrt(D) into wq,
    #  * cast weights AND activations to the MXU dtype (halves activation DMA).
    wq_t = (wq.T * scale).astype(mm_dtype)                                # (H, D)
    wk_t = wk.T.astype(mm_dtype)                                          # (H, D)
    wv_t = wv.T.astype(mm_dtype)                                          # (H, D)
    xq = query.astype(mm_dtype)
    xk = key.astype(mm_dtype)
    xv = value.astype(mm_dtype)

    # Per-generation VMEM budget and query-tile size.  Live per-step bytes are
    # dominated by the (TQ, S) attn output double-buffer + f32 intermediates
    # plus the full-S K/V blocks & projection scratch; shrink TQ until it fits.
    vmem_limit = _vmem_budget_bytes()
    mm_isz = jnp.dtype(mm_dtype).itemsize
    attn_isz = attn_dt.itemsize
    tq = min(S, q_block)

    def _live_bytes(tq_):
        return (tq_ * S * (2 * attn_isz + 3 * 4)            # attn dbl-buf + s/p/attn f32
                + 2 * S * (H + D) * mm_isz                   # xk/xv blocks + k/v scratch
                + 2 * tq_ * (H + D) * mm_isz)                # xq + out buffers (approx)

    while tq > 8 and _live_bytes(tq) > vmem_limit // 2:
        tq //= 2
    n_q = pl.cdiv(S, tq)
    # NOTE: if S % tq != 0 the tail query block reads garbage rows; their
    # writes are discarded (row-wise softmax confines any Inf/NaN to them).

    kernel = functools.partial(_self_attention_kernel,
                               mm_dtype=mm_dtype,
                               approx_recip=(mm_dtype != jnp.float32))

    in_specs = [
        pl.BlockSpec((None, tq, H), lambda b, qi: (b, qi, 0)),   # query tile
        pl.BlockSpec((None, S, H), lambda b, qi: (b, 0, 0)),     # key (full S, per batch)
        pl.BlockSpec((None, S, H), lambda b, qi: (b, 0, 0)),     # value (full S, per batch)
        pl.BlockSpec((H, D), lambda b, qi: (0, 0)),              # wq_t (VMEM resident)
        pl.BlockSpec((H, D), lambda b, qi: (0, 0)),              # wk_t (VMEM resident)
        pl.BlockSpec((H, D), lambda b, qi: (0, 0)),              # wv_t (VMEM resident)
    ]
    out_specs = [
        pl.BlockSpec((None, tq, D), lambda b, qi: (b, qi, 0)),   # weighted_v
        pl.BlockSpec((None, tq, S), lambda b, qi: (b, qi, 0)),   # attention_score
    ]
    out_shapes = (
        jax.ShapeDtypeStruct((B, S, D), out_dtype),
        jax.ShapeDtypeStruct((B, S, S), attn_dt),
    )
    scratch_shapes = [
        pltpu.VMEM((S, D), mm_dtype),   # k_proj (per-batch, persists across qi)
        pltpu.VMEM((S, D), mm_dtype),   # v_proj
    ]

    weighted_v, attn = pl.pallas_call(
        kernel,
        out_shape=out_shapes,
        grid_spec=pltpu.PrefetchScalarGridSpec(
            num_scalar_prefetch=0,
            grid=(B, n_q),
            in_specs=in_specs,
            out_specs=out_specs,
            scratch_shapes=scratch_shapes,
        ),
        compiler_params=pltpu.CompilerParams(
            # qi must be "arbitrary": per-batch K/V projection init at qi==0.
            dimension_semantics=("parallel", "arbitrary"),
            vmem_limit_bytes=vmem_limit,
        ),
    )(xq, xk, xv, wq_t, wk_t, wv_t)

    return weighted_v, attn


def self_attention_ref(query, key, value, wq, wk, wv):
    """Pure-JAX f32 reference mirroring the PyTorch forward (mask=None, eval)."""
    D = wq.shape[0]
    q = jnp.einsum("bsh,dh->bsd", query, wq)
    k = jnp.einsum("bsh,dh->bsd", key, wk)
    v = jnp.einsum("bsh,dh->bsd", value, wv)
    s = jnp.einsum("bqd,bkd->bqk", q, k) / jnp.sqrt(jnp.float32(D))
    attn = jax.nn.softmax(s, axis=-1)
    out = jnp.einsum("bqk,bkd->bqd", attn, v)
    return out, attn


if __name__ == "__main__":
    # params: hidden_dim=32, n_head=4 -> attention_dim=8; batch=2, seq=8
    B, S, H, N_HEAD = 2, 8, 32, 4
    D = H // N_HEAD

    key_root = jax.random.PRNGKey(0)
    kq, kk, kv, kwq, kwk, kwv = jax.random.split(key_root, 6)

    query = jax.random.normal(kq, (B, S, H), dtype=jnp.float32)
    key_x = jax.random.normal(kk, (B, S, H), dtype=jnp.float32)
    value = jax.random.normal(kv, (B, S, H), dtype=jnp.float32)

    # Deterministic "xavier-like" init for the three Linear weights [D, H].
    bound = math.sqrt(6.0 / (H + D))
    wq = jax.random.uniform(kwq, (D, H), jnp.float32, -bound, bound)
    wk = jax.random.uniform(kwk, (D, H), jnp.float32, -bound, bound)
    wv = jax.random.uniform(kwv, (D, H), jnp.float32, -bound, bound)

    ref_out, ref_attn = self_attention_ref(query, key_x, value, wq, wk, wv)

    # Default fast path: bf16 MXU inputs + bf16 attn writeback, f32 softmax.
    weighted_v, attn_score = self_attention(query, key_x, value, wq, wk, wv)
    jax.block_until_ready((weighted_v, attn_score))
    assert jnp.allclose(weighted_v, ref_out, atol=2e-2, rtol=2e-2)
    assert jnp.allclose(attn_score.astype(jnp.float32), ref_attn, atol=2e-2, rtol=2e-2)

    # Full-f32 MXU path (exact reciprocal, f32 attn) for a tighter check.
    wv32, attn32 = self_attention(query, key_x, value, wq, wk, wv,
                                  matmul_dtype=jnp.float32,
                                  attn_dtype=jnp.float32)
    jax.block_until_ready((wv32, attn32))
    assert jnp.allclose(wv32, ref_out, atol=5e-3, rtol=5e-3)
    assert jnp.allclose(attn32, ref_attn, atol=5e-3, rtol=5e-3)

    print("KERNEL_OK")
</pallas_src>

<mosaic_0001>
module attributes {stable_mosaic.version = 11 : i64} {
  func.func @_self_attention_kernel(%arg0: i32, %arg1: i32, %arg2: memref<1x8x32xbf16, #tpu.memory_space<vmem>>, %arg3: memref<1x8x32xbf16, #tpu.memory_space<vmem>>, %arg4: memref<1x8x32xbf16, #tpu.memory_space<vmem>>, %arg5: memref<32x8xbf16, #tpu.memory_space<vmem>>, %arg6: memref<32x8xbf16, #tpu.memory_space<vmem>>, %arg7: memref<32x8xbf16, #tpu.memory_space<vmem>>, %arg8: memref<1x8x8xf32, #tpu.memory_space<vmem>>, %arg9: memref<1x8x8xbf16, #tpu.memory_space<vmem>>, %arg10: memref<8x8xbf16, #tpu.memory_space<vmem>>, %arg11: memref<8x8xbf16, #tpu.memory_space<vmem>>) attributes {dimension_semantics = [#tpu.dimension_semantics<parallel>, #tpu.dimension_semantics<arbitrary>], iteration_bounds = array<i64: 2, 1>, scalar_prefetch = 0 : i64, scratch_operands = 2 : i64, tpu.core_type = #tpu.core_type<tc>, window_params = [{transform_indices = @transform_0, window_bounds = array<i64: 1, 8, 32>}, {transform_indices = @transform_1, window_bounds = array<i64: 1, 8, 32>}, {transform_indices = @transform_2, window_bounds = array<i64: 1, 8, 32>}, {pipeline_mode = #tpu.pipeline_mode<synchronous>, transform_indices = @transform_3, window_bounds = array<i64: 32, 8>}, {pipeline_mode = #tpu.pipeline_mode<synchronous>, transform_indices = @transform_4, window_bounds = array<i64: 32, 8>}, {pipeline_mode = #tpu.pipeline_mode<synchronous>, transform_indices = @transform_5, window_bounds = array<i64: 32, 8>}, {transform_indices = @transform_6, window_bounds = array<i64: 1, 8, 8>}, {transform_indices = @transform_7, window_bounds = array<i64: 1, 8, 8>}]} {
    %c0_i32 = arith.constant 0 : i32
    %0 = arith.cmpi eq, %arg1, %c0_i32 : i32
    %1 = arith.extui %0 : i1 to i32
    %c0_i32_0 = arith.constant 0 : i32
    %2 = arith.cmpi ne, %1, %c0_i32_0 : i32
    scf.if %2 {
      %c0_19 = arith.constant 0 : index
      %c0_20 = arith.constant 0 : index
      %c0_21 = arith.constant 0 : index
      %30 = vector.load %arg3[%c0_19, %c0_20, %c0_21] : memref<1x8x32xbf16, #tpu.memory_space<vmem>>, vector<1x8x32xbf16>
      %31 = vector.shape_cast %30 : vector<1x8x32xbf16> to vector<8x32xbf16>
      %c0_22 = arith.constant 0 : index
      %c0_23 = arith.constant 0 : index
      %32 = vector.load %arg6[%c0_22, %c0_23] : memref<32x8xbf16, #tpu.memory_space<vmem>>, vector<32x8xbf16>
      %cst_24 = arith.constant dense<0.000000e+00> : vector<8x8xf32>
      %33 = tpu.matmul %31, %32, %cst_24 {dimension_numbers = #tpu.dot_dimension_numbers<[1], [0], [0], [1], [0, 0, 1, 1], [], []>} : vector<8x32xbf16>, vector<32x8xbf16>, vector<8x8xf32> -> vector<8x8xf32>
      %34 = arith.truncf %33 : vector<8x8xf32> to vector<8x8xbf16>
      %c0_25 = arith.constant 0 : index
      %c0_26 = arith.constant 0 : index
      %35 = vector.load %arg10[%c0_25, %c0_26] : memref<8x8xbf16, #tpu.memory_space<vmem>>, vector<8x8xbf16>
      tpu.vector_store %arg10[%c0_25, %c0_26], %34 {strides = array<i32>} : memref<8x8xbf16, #tpu.memory_space<vmem>>, vector<8x8xbf16>,
      %c0_27 = arith.constant 0 : index
      %c0_28 = arith.constant 0 : index
      %c0_29 = arith.constant 0 : index
      %36 = vector.load %arg4[%c0_27, %c0_28, %c0_29] : memref<1x8x32xbf16, #tpu.memory_space<vmem>>, vector<1x8x32xbf16>
      %37 = vector.shape_cast %36 : vector<1x8x32xbf16> to vector<8x32xbf16>
      %c0_30 = arith.constant 0 : index
      %c0_31 = arith.constant 0 : index
      %38 = vector.load %arg7[%c0_30, %c0_31] : memref<32x8xbf16, #tpu.memory_space<vmem>>, vector<32x8xbf16>
      %cst_32 = arith.constant dense<0.000000e+00> : vector<8x8xf32>
      %39 = tpu.matmul %37, %38, %cst_32 {dimension_numbers = #tpu.dot_dimension_numbers<[1], [0], [0], [1], [0, 0, 1, 1], [], []>} : vector<8x32xbf16>, vector<32x8xbf16>, vector<8x8xf32> -> vector<8x8xf32>
      %40 = arith.truncf %39 : vector<8x8xf32> to vector<8x8xbf16>
      %c0_33 = arith.constant 0 : index
      %c0_34 = arith.constant 0 : index
      %41 = vector.load %arg11[%c0_33, %c0_34] : memref<8x8xbf16, #tpu.memory_space<vmem>>, vector<8x8xbf16>
      tpu.vector_store %arg11[%c0_33, %c0_34], %40 {strides = array<i32>} : memref<8x8xbf16, #tpu.memory_space<vmem>>, vector<8x8xbf16>,
    } else {
    }
    %c0 = arith.constant 0 : index
    %c0_1 = arith.constant 0 : index
    %c0_2 = arith.constant 0 : index
    %3 = vector.load %arg2[%c0, %c0_1, %c0_2] : memref<1x8x32xbf16, #tpu.memory_space<vmem>>, vector<1x8x32xbf16>
    %4 = vector.shape_cast %3 : vector<1x8x32xbf16> to vector<8x32xbf16>
    %c0_3 = arith.constant 0 : index
    %c0_4 = arith.constant 0 : index
    %5 = vector.load %arg5[%c0_3, %c0_4] : memref<32x8xbf16, #tpu.memory_space<vmem>>, vector<32x8xbf16>
    %cst = arith.constant dense<0.000000e+00> : vector<8x8xf32>
    %6 = tpu.matmul %4, %5, %cst {dimension_numbers = #tpu.dot_dimension_numbers<[1], [0], [0], [1], [0, 0, 1, 1], [], []>} : vector<8x32xbf16>, vector<32x8xbf16>, vector<8x8xf32> -> vector<8x8xf32>
    %7 = arith.truncf %6 : vector<8x8xf32> to vector<8x8xbf16>
    %c0_5 = arith.constant 0 : index
    %c0_6 = arith.constant 0 : index
    %8 = vector.load %arg10[%c0_5, %c0_6] : memref<8x8xbf16, #tpu.memory_space<vmem>>, vector<8x8xbf16>
    %cst_7 = arith.constant dense<0.000000e+00> : vector<8x8xf32>
    %9 = tpu.matmul %7, %8, %cst_7 {dimension_numbers = #tpu.dot_dimension_numbers<[1], [1], [0], [0], [0, 0, 1, 0], [], []>} : vector<8x8xbf16>, vector<8x8xbf16>, vector<8x8xf32> -> vector<8x8xf32>
    %cst_8 = arith.constant dense<0xFF800000> : vector<8xf32>
    %10 = vector.multi_reduction <maximumf>, %9, %cst_8 [1] : vector<8x8xf32> to vector<8xf32>
    %11 = vector.shape_cast %10 : vector<8xf32> to vector<8x1xf32>
    %12 = vector.broadcast %11 : vector<8x1xf32> to vector<8x8xf32>
    %13 = arith.subf %9, %12 : vector<8x8xf32>
    %14 = math.exp %13 : vector<8x8xf32>
    %cst_9 = arith.constant dense<0.000000e+00> : vector<8xf32>
    %15 = vector.multi_reduction <add>, %14, %cst_9 [1] : vector<8x8xf32> to vector<8xf32>
    %16 = vector.shape_cast %15 : vector<8xf32> to vector<8x1xf32>
    %17 = tpu.reciprocal %16 {approx = true} : vector<8x1xf32> -> vector<8x1xf32>
    %18 = vector.broadcast %17 : vector<8x1xf32> to vector<8x8xf32>
    %19 = arith.mulf %14, %18 : vector<8x8xf32>
    %20 = arith.truncf %19 : vector<8x8xf32> to vector<8x8xbf16>
    %c0_10 = arith.constant 0 : index
    %c0_11 = arith.constant 0 : index
    %c0_12 = arith.constant 0 : index
    %21 = vector.load %arg9[%c0_10, %c0_11, %c0_12] : memref<1x8x8xbf16, #tpu.memory_space<vmem>>, vector<1x8x8xbf16>
    %22 = vector.shape_cast %21 : vector<1x8x8xbf16> to vector<8x8xbf16>
    %23 = vector.shape_cast %20 : vector<8x8xbf16> to vector<1x8x8xbf16>
    tpu.vector_store %arg9[%c0_10, %c0_11, %c0_12], %23 {strides = array<i32>} : memref<1x8x8xbf16, #tpu.memory_space<vmem>>, vector<1x8x8xbf16>,
    %24 = arith.truncf %19 : vector<8x8xf32> to vector<8x8xbf16>
    %c0_13 = arith.constant 0 : index
    %c0_14 = arith.constant 0 : index
    %25 = vector.load %arg11[%c0_13, %c0_14] : memref<8x8xbf16, #tpu.memory_space<vmem>>, vector<8x8xbf16>
    %cst_15 = arith.constant dense<0.000000e+00> : vector<8x8xf32>
    %26 = tpu.matmul %24, %25, %cst_15 {dimension_numbers = #tpu.dot_dimension_numbers<[1], [0], [0], [1], [0, 0, 1, 1], [], []>} : vector<8x8xbf16>, vector<8x8xbf16>, vector<8x8xf32> -> vector<8x8xf32>
    %c0_16 = arith.constant 0 : index
    %c0_17 = arith.constant 0 : index
    %c0_18 = arith.constant 0 : index
    %27 = vector.load %arg8[%c0_16, %c0_17, %c0_18] : memref<1x8x8xf32, #tpu.memory_space<vmem>>, vector<1x8x8xf32>
    %28 = vector.shape_cast %27 : vector<1x8x8xf32> to vector<8x8xf32>
    %29 = vector.shape_cast %26 : vector<8x8xf32> to vector<1x8x8xf32>
    tpu.vector_store %arg8[%c0_16, %c0_17, %c0_18], %29 {strides = array<i32>} : memref<1x8x8xf32, #tpu.memory_space<vmem>>, vector<1x8x8xf32>,
    return
  }
  func.func @transform_0(%arg0: i32, %arg1: i32) -> (i32, i32, i32) {
    %c0_i32 = arith.constant 0 : i32
    %c0_i32_0 = arith.constant 0 : i32
    return %arg0, %arg1, %c0_i32 : i32, i32, i32
  }
  func.func @transform_1(%arg0: i32, %arg1: i32) -> (i32, i32, i32) {
    %c0_i32 = arith.constant 0 : i32
    %c0_i32_0 = arith.constant 0 : i32
    %c0_i32_1 = arith.constant 0 : i32
    return %arg0, %c0_i32, %c0_i32_0 : i32, i32, i32
  }
  func.func @transform_2(%arg0: i32, %arg1: i32) -> (i32, i32, i32) {
    %c0_i32 = arith.constant 0 : i32
    %c0_i32_0 = arith.constant 0 : i32
    %c0_i32_1 = arith.constant 0 : i32
    return %arg0, %c0_i32, %c0_i32_0 : i32, i32, i32
  }
  func.func @transform_3(%arg0: i32, %arg1: i32) -> (i32, i32) {
    %c0_i32 = arith.constant 0 : i32
    %c0_i32_0 = arith.constant 0 : i32
    %c0_i32_1 = arith.constant 0 : i32
    return %c0_i32, %c0_i32_0 : i32, i32
  }
  func.func @transform_4(%arg0: i32, %arg1: i32) -> (i32, i32) {
    %c0_i32 = arith.constant 0 : i32
    %c0_i32_0 = arith.constant 0 : i32
    %c0_i32_1 = arith.constant 0 : i32
    return %c0_i32, %c0_i32_0 : i32, i32
  }
  func.func @transform_5(%arg0: i32, %arg1: i32) -> (i32, i32) {
    %c0_i32 = arith.constant 0 : i32
    %c0_i32_0 = arith.constant 0 : i32
    %c0_i32_1 = arith.constant 0 : i32
    return %c0_i32, %c0_i32_0 : i32, i32
  }
  func.func @transform_6(%arg0: i32, %arg1: i32) -> (i32, i32, i32) {
    %c0_i32 = arith.constant 0 : i32
    %c0_i32_0 = arith.constant 0 : i32
    return %arg0, %arg1, %c0_i32 : i32, i32, i32
  }
  func.func @transform_7(%arg0: i32, %arg1: i32) -> (i32, i32, i32) {
    %c0_i32 = arith.constant 0 : i32
    %c0_i32_0 = arith.constant 0 : i32
    return %arg0, %arg1, %c0_i32 : i32, i32, i32
  }
}

</mosaic_0001>

<llo_original>
// kernel: tpu_custom_call.1
$region0: #{tpu_custom_call.1}
  #allocation0 [shape = 'u32[]', space=smem, size = 0x4, offset = 0x4, fixed_abs, tag = 'smem constant byte address 0x4 - core index']
  #allocation1 [shape = 'u32[144,128]{1,0:T(1,128)}', space=vmem, size = 0x12000, scoped, tag = 'internal scratch']
  #allocation2 [shape = 'bf16[8,8]{1,0:T(8,128)(2,1)}', space=vmem, size = 0x800, scoped, tag = 'scratch operand']
  #allocation3 [shape = 'bf16[8,8]{1,0:T(8,128)(2,1)}', space=vmem, size = 0x800, scoped, tag = 'scratch operand']
  %s0 = inlined_call_operand.vmem [shape: bf16[2,8,32], index: 0, kind: input, shape index: {}]
  %s1 = inlined_call_operand.vmem [shape: bf16[2,8,32], index: 1, kind: input, shape index: {}]
  %s2 = inlined_call_operand.vmem [shape: bf16[2,8,32], index: 2, kind: input, shape index: {}]
  %s3 = inlined_call_operand.vmem [shape: bf16[32,8], index: 3, kind: input, shape index: {}]
  %s4 = inlined_call_operand.vmem [shape: bf16[32,8], index: 4, kind: input, shape index: {}]
  %s5 = inlined_call_operand.vmem [shape: bf16[32,8], index: 5, kind: input, shape index: {}]
  %s6 = inlined_call_operand.hbm [shape: f32[2,8,8], index: 6, kind: output, shape index: {0}]
  %s7 = inlined_call_operand.hbm [shape: bf16[2,8,8], index: 7, kind: output, shape index: {1}]
  %8 = xla_tuple %s6, %s7
  %s9 = sld [smem:[#allocation0]]
  $region69: #{tpu_custom_call.1} parent=0
    _
  %s11 = ssub.s32 1, %s9
  %s12 = scalar_select 0, %s11, %s9
  $region1: #{tpu_custom_call.1} parent=0
    #allocation4 [shape = 'u8[8192]{0}', space=vmem, size = 0x2000, scoped, tag = 'output window, operand 0']
    #allocation5 [shape = 's32[2]{0}', space=sflag, size = 0x8, scoped, tag = 'scoped memory for tpu_custom_call.1']
    #allocation6 [shape = 'u8[4096]{0}', space=vmem, size = 0x1000, scoped, tag = 'output window, operand 1']
    #allocation7 [shape = 's32[2]{0}', space=sflag, size = 0x8, scoped, tag = 'scoped memory for tpu_custom_call.1']
    %13 = vsyncpa [#allocation5], 0
    %s14 = scalar_lea.sflag [#allocation5], 1
    %15 = vsyncpa %s14, 0
    %16 = vsyncpa [#allocation7], 0
    %s17 = scalar_lea.sflag [#allocation7], 1
    %18 = vsyncpa %s17, 0
    loop: start=0, step=1, limit=4
    $region2: #{tpu_custom_call.1} parent=1 // loop_pre_header
      _
    $region3: #{tpu_custom_call.1} parent=1 // loop_header
      %s20 = sphi 0, %s24
      %p21 = scmp.ge.s32.totalorder %s20, 4
      %s27 = sphi 0, %s39
      %s28 = sphi 0, %s35
      %s29 = sphi 0, %s27
      %s30 = sphi 0, %s28
      %s31 = sphi 0, %s29
      %s32 = sphi 0, %s30
      %s44 = sphi 0, %s46
      %s47 = sphi 0, %s44
      %s48 = sphi 0, %s47
      %s64 = sphi 0, %s48
      %s70 = sphi 0, %s72
      %s73 = sphi 0, %s70
      %s74 = sphi 0, %s73
      %s90 = sphi 0, %s74
      %s96 = sphi 0, %s98
      %s99 = sphi 0, %s96
      %s100 = sphi 0, %s99
      %s116 = sphi 0, %s100
      %s120 = sphi 0, %s120
      %s122 = sphi 0, %s120
      %s123 = sphi 0, %s122
      %s137 = sphi 0, %s123
      %s141 = sphi 0, %s141
      %s143 = sphi 0, %s141
      %s144 = sphi 0, %s143
      %s158 = sphi 0, %s144
      %s162 = sphi 0, %s162
      %s164 = sphi 0, %s162
      %s165 = sphi 0, %s164
      %s179 = sphi 0, %s165
      %s187 = sphi 0, %s189
      %s190 = sphi 0, %s187
      %s191 = sphi 0, %s190
      %s207 = sphi 0, %s191
      %s215 = sphi 0, %s217
      %s218 = sphi 0, %s215
      %s219 = sphi 0, %s218
      %s235 = sphi 0, %s219
    $region4: #{tpu_custom_call.1} parent=1 // loop_header_branch
      %23 = sbr.rel (%p21) target = $region8
    $region5: #{tpu_custom_call.1} parent=1 // loop_body
      %s25 = ssub.s32 %s20, 1
      %s26 = ssub.s32 %s20, 2
      %s33 = sadd.s32 1, %s28
      %p34 = scmp.ge.s32.totalorder %s33, 1
      %s35 = scalar_select %p34, 0, %s33
      %s36 = sadd.s32 1, %s27
      %s37 = scalar_select %p34, %s36, %s27
      %p38 = scmp.ge.s32.totalorder %s37, 2
      %s39 = scalar_select %p38, 0, %s37
      %s40 = ssub.s32 %s27, %s39
      %s41 = ssub.s32 %s28, %s35
      %s42 = sor.u32 %s40, %s41
      %p43 = scmp.eq.s32.totalorder %s42, 0
      %s45 = sadd.s32 %s44, 1
      %s46 = scalar_select %p43, %s44, %s45
      %p49 = pneg %p43
      %p50 = scmp.eq.s32.totalorder %s20, 1
      %p51 = por %p49, %p50
      %p52 = scmp.ne.s32.totalorder %s44, %s47
      %p53 = scmp.eq.s32.totalorder %s20, 0
      %p54 = por %p52, %p53
      %p55 = scmp.ne.s32.totalorder %s44, %s47
      %p56 = scmp.eq.s32.totalorder %s25, 1
      %p57 = por %p55, %p56
      %p58 = scmp.ne.s32.totalorder %s47, %s48
      %p59 = scmp.eq.s32.totalorder %s25, 0
      %p60 = por %p58, %p59
      %p61 = scmp.ne.s32.totalorder %s47, %s48
      %p62 = scmp.eq.s32.totalorder %s26, 1
      %p63 = por %p61, %p62
      %p65 = scmp.ne.s32.totalorder %s48, %s64
      %p66 = scmp.eq.s32.totalorder %s26, 0
      %p67 = por %p65, %p66
      %s68 = ssub.s32 %s27, %s39
      %p69 = scmp.eq.s32.totalorder %s68, 0
      %s71 = sadd.s32 %s70, 1
      %s72 = scalar_select %p69, %s70, %s71
      %p75 = pneg %p69
      %p76 = scmp.eq.s32.totalorder %s20, 1
      %p77 = por %p75, %p76
      %p78 = scmp.ne.s32.totalorder %s70, %s73
      %p79 = scmp.eq.s32.totalorder %s20, 0
      %p80 = por %p78, %p79
      %p81 = scmp.ne.s32.totalorder %s70, %s73
      %p82 = scmp.eq.s32.totalorder %s25, 1
      %p83 = por %p81, %p82
      %p84 = scmp.ne.s32.totalorder %s73, %s74
      %p85 = scmp.eq.s32.totalorder %s25, 0
      %p86 = por %p84, %p85
      %p87 = scmp.ne.s32.totalorder %s73, %s74
      %p88 = scmp.eq.s32.totalorder %s26, 1
      %p89 = por %p87, %p88
      %p91 = scmp.ne.s32.totalorder %s74, %s90
      %p92 = scmp.eq.s32.totalorder %s26, 0
      %p93 = por %p91, %p92
      %s94 = ssub.s32 %s27, %s39
      %p95 = scmp.eq.s32.totalorder %s94, 0
      %s97 = sadd.s32 %s96, 1
      %s98 = scalar_select %p95, %s96, %s97
      %p101 = pneg %p95
      %p102 = scmp.eq.s32.totalorder %s20, 1
      %p103 = por %p101, %p102
      %p104 = scmp.ne.s32.totalorder %s96, %s99
      %p105 = scmp.eq.s32.totalorder %s20, 0
      %p106 = por %p104, %p105
      %p107 = scmp.ne.s32.totalorder %s96, %s99
      %p108 = scmp.eq.s32.totalorder %s25, 1
      %p109 = por %p107, %p108
      %p110 = scmp.ne.s32.totalorder %s99, %s100
      %p111 = scmp.eq.s32.totalorder %s25, 0
      %p112 = por %p110, %p111
      %p113 = scmp.ne.s32.totalorder %s99, %s100
      %p114 = scmp.eq.s32.totalorder %s26, 1
      %p115 = por %p113, %p114
      %p117 = scmp.ne.s32.totalorder %s100, %s116
      %p118 = scmp.eq.s32.totalorder %s26, 0
      %p119 = por %p117, %p118
      %s121 = sadd.s32 %s120, 1
      %p124 = scmp.eq.s32.totalorder %s20, 1
      %p125 = scmp.ne.s32.totalorder %s120, %s122
      %p126 = scmp.eq.s32.totalorder %s20, 0
      %p127 = por %p125, %p126
      %p128 = scmp.ne.s32.totalorder %s120, %s122
      %p129 = scmp.eq.s32.totalorder %s25, 1
      %p130 = por %p128, %p129
      %p131 = scmp.ne.s32.totalorder %s122, %s123
      %p132 = scmp.eq.s32.totalorder %s25, 0
      %p133 = por %p131, %p132
      %p134 = scmp.ne.s32.totalorder %s122, %s123
      %p135 = scmp.eq.s32.totalorder %s26, 1
      %p136 = por %p134, %p135
      %p138 = scmp.ne.s32.totalorder %s123, %s137
      %p139 = scmp.eq.s32.totalorder %s26, 0
      %p140 = por %p138, %p139
      %s142 = sadd.s32 %s141, 1
      %p145 = scmp.eq.s32.totalorder %s20, 1
      %p146 = scmp.ne.s32.totalorder %s141, %s143
      %p147 = scmp.eq.s32.totalorder %s20, 0
      %p148 = por %p146, %p147
      %p149 = scmp.ne.s32.totalorder %s141, %s143
      %p150 = scmp.eq.s32.totalorder %s25, 1
      %p151 = por %p149, %p150
      %p152 = scmp.ne.s32.totalorder %s143, %s144
      %p153 = scmp.eq.s32.totalorder %s25, 0
      %p154 = por %p152, %p153
      %p155 = scmp.ne.s32.totalorder %s143, %s144
      %p156 = scmp.eq.s32.totalorder %s26, 1
      %p157 = por %p155, %p156
      %p159 = scmp.ne.s32.totalorder %s144, %s158
      %p160 = scmp.eq.s32.totalorder %s26, 0
      %p161 = por %p159, %p160
      %s163 = sadd.s32 %s162, 1
      %p166 = scmp.eq.s32.totalorder %s20, 1
      %p167 = scmp.ne.s32.totalorder %s162, %s164
      %p168 = scmp.eq.s32.totalorder %s20, 0
      %p169 = por %p167, %p168
      %p170 = scmp.ne.s32.totalorder %s162, %s164
      %p171 = scmp.eq.s32.totalorder %s25, 1
      %p172 = por %p170, %p171
      %p173 = scmp.ne.s32.totalorder %s164, %s165
      %p174 = scmp.eq.s32.totalorder %s25, 0
      %p175 = por %p173, %p174
      %p176 = scmp.ne.s32.totalorder %s164, %s165
      %p177 = scmp.eq.s32.totalorder %s26, 1
      %p178 = por %p176, %p177
      %p180 = scmp.ne.s32.totalorder %s165, %s179
      %p181 = scmp.eq.s32.totalorder %s26, 0
      %p182 = por %p180, %p181
      %s183 = ssub.s32 %s27, %s39
      %s184 = ssub.s32 %s28, %s35
      %s185 = sor.u32 %s183, %s184
      %p186 = scmp.eq.s32.totalorder %s185, 0
      %s188 = sadd.s32 %s187, 1
      %s189 = scalar_select %p186, %s187, %s188
      %p192 = pneg %p186
      %p193 = scmp.eq.s32.totalorder %s20, 1
      %p194 = por %p192, %p193
      %p195 = scmp.ne.s32.totalorder %s187, %s190
      %p196 = scmp.eq.s32.totalorder %s20, 0
      %p197 = por %p195, %p196
      %p198 = scmp.ne.s32.totalorder %s187, %s190
      %p199 = scmp.eq.s32.totalorder %s25, 1
      %p200 = por %p198, %p199
      %p201 = scmp.ne.s32.totalorder %s190, %s191
      %p202 = scmp.eq.s32.totalorder %s25, 0
      %p203 = por %p201, %p202
      %p204 = scmp.ne.s32.totalorder %s190, %s191
      %p205 = scmp.eq.s32.totalorder %s26, 1
      %p206 = por %p204, %p205
      %p208 = scmp.ne.s32.totalorder %s191, %s207
      %p209 = scmp.eq.s32.totalorder %s26, 0
      %p210 = por %p208, %p209
      %s211 = ssub.s32 %s27, %s39
      %s212 = ssub.s32 %s28, %s35
      %s213 = sor.u32 %s211, %s212
      %p214 = scmp.eq.s32.totalorder %s213, 0
      %s216 = sadd.s32 %s215, 1
      %s217 = scalar_select %p214, %s215, %s216
      %p220 = pneg %p214
      %p221 = scmp.eq.s32.totalorder %s20, 1
      %p222 = por %p220, %p221
      %p223 = scmp.ne.s32.totalorder %s215, %s218
      %p224 = scmp.eq.s32.totalorder %s20, 0
      %p225 = por %p223, %p224
      %p226 = scmp.ne.s32.totalorder %s215, %s218
      %p227 = scmp.eq.s32.totalorder %s25, 1
      %p228 = por %p226, %p227
      %p229 = scmp.ne.s32.totalorder %s218, %s219
      %p230 = scmp.eq.s32.totalorder %s25, 0
      %p231 = por %p229, %p230
      %p232 = scmp.ne.s32.totalorder %s218, %s219
      %p233 = scmp.eq.s32.totalorder %s26, 1
      %p234 = por %p232, %p233
      %p236 = scmp.ne.s32.totalorder %s219, %s235
      %p237 = scmp.eq.s32.totalorder %s26, 0
      %p238 = por %p236, %p237
      %p239 = scmp.le.s32.totalorder 1, %s20
      %p240 = scmp.lt.s32.totalorder %s20, 3
      %p241 = pnand %p239, %p240
      %p242 = pneg %p241
      // Predicated region
      $region9: #{tpu_custom_call.1} parent=5 // pred_check
        _
      $region10: #{tpu_custom_call.1} parent=5 // pred_check_branch
        %244 = sbr.rel (%p241) target = $region12
      $region11: #{tpu_custom_call.1} parent=5 // pred_region
        %s245 = ssub.s32 %s20, 1
        // Predicated region
        $region13: #{tpu_custom_call.1} parent=11 // pred_check
          %p246 = pneg %p133
        $region14: #{tpu_custom_call.1} parent=11 // pred_check_branch
          %248 = sbr.rel (%p246) target = $region16
        $region15: #{tpu_custom_call.1} parent=11 // pred_region
          _
        $region16: #{tpu_custom_call.1} parent=11 // pred_fallthru
          _
        // Predicated region
        $region17: #{tpu_custom_call.1} parent=11 // pred_check
          %p249 = pneg %p154
        $region18: #{tpu_custom_call.1} parent=11 // pred_check_branch
          %251 = sbr.rel (%p249) target = $region20
        $region19: #{tpu_custom_call.1} parent=11 // pred_region
          _
        $region20: #{tpu_custom_call.1} parent=11 // pred_fallthru
          _
        // Predicated region
        $region21: #{tpu_custom_call.1} parent=11 // pred_check
          %p252 = pneg %p175
        $region22: #{tpu_custom_call.1} parent=11 // pred_check_branch
          %254 = sbr.rel (%p252) target = $region24
        $region23: #{tpu_custom_call.1} parent=11 // pred_region
          _
        $region24: #{tpu_custom_call.1} parent=11 // pred_fallthru
          _
      $region12: #{tpu_custom_call.1} parent=5 // pred_fallthru
        _
      %p255 = scmp.lt.s32.totalorder %s20, 2
      // Predicated region
      $region25: #{tpu_custom_call.1} parent=5 // pred_check
        %p256 = pneg %p255
      $region26: #{tpu_custom_call.1} parent=5 // pred_check_branch
        %258 = sbr.rel (%p256) target = $region28
      $region27: #{tpu_custom_call.1} parent=5 // pred_region
        // Predicated region
        $region29: #{tpu_custom_call.1} parent=27 // pred_check
          %p259 = pneg %p54
        $region30: #{tpu_custom_call.1} parent=27 // pred_check_branch
          %261 = sbr.rel (%p259) target = $region32
        $region31: #{tpu_custom_call.1} parent=27 // pred_region
          %p262 = scmp.lt.s32.totalorder %s27, 1
          %s263 = scalar_select %p262, %s27, 1
          %p264 = scmp.lt.s32.totalorder %s28, 0
          %s265 = scalar_select %p264, %s28, 0
          %s266 = sadd.s32 %s265, %s263
          %s267 = smul.addr %s266, 4
          %s268 = scalar_lea.vmem %s0, %s267
        $region32: #{tpu_custom_call.1} parent=27 // pred_fallthru
          _
        // Predicated region
        $region33: #{tpu_custom_call.1} parent=27 // pred_check
          %p269 = pneg %p80
        $region34: #{tpu_custom_call.1} parent=27 // pred_check_branch
          %271 = sbr.rel (%p269) target = $region36
        $region35: #{tpu_custom_call.1} parent=27 // pred_region
          %p272 = scmp.lt.s32.totalorder %s27, 1
          %s273 = scalar_select %p272, %s27, 1
          %s274 = smul.addr %s273, 4
          %s275 = scalar_lea.vmem %s1, %s274
        $region36: #{tpu_custom_call.1} parent=27 // pred_fallthru
          _
        // Predicated region
        $region37: #{tpu_custom_call.1} parent=27 // pred_check
          %p276 = pneg %p106
        $region38: #{tpu_custom_call.1} parent=27 // pred_check_branch
          %278 = sbr.rel (%p276) target = $region40
        $region39: #{tpu_custom_call.1} parent=27 // pred_region
          %p279 = scmp.lt.s32.totalorder %s27, 1
          %s280 = scalar_select %p279, %s27, 1
          %s281 = smul.addr %s280, 4
          %s282 = scalar_lea.vmem %s2, %s281
        $region40: #{tpu_custom_call.1} parent=27 // pred_fallthru
          _
      $region28: #{tpu_custom_call.1} parent=5 // pred_fallthru
        _
      %p283 = scmp.le.s32.totalorder 1, %s20
      %p284 = scmp.lt.s32.totalorder %s20, 3
      %p285 = pnand %p283, %p284
      %p286 = pneg %p285
      // Predicated region
      $region41: #{tpu_custom_call.1} parent=5 // pred_check
        _
      $region42: #{tpu_custom_call.1} parent=5 // pred_check_branch
        %288 = sbr.rel (%p285) target = $region44
      $region43: #{tpu_custom_call.1} parent=5 // pred_region
        %s289 = ssub.s32 %s20, 1
        %p290 = scmp.lt.s32.totalorder %s29, 1
        %s291 = scalar_select %p290, %s29, 1
        %p292 = scmp.lt.s32.totalorder %s30, 0
        %s293 = scalar_select %p292, %s30, 0
        %s294 = sadd.s32 %s293, %s291
        %s295 = smul.addr %s294, 4
        %s296 = scalar_lea.vmem %s0, %s295
        %p297 = pneg %p60
        %p298 = pneg %p57
        %p299 = scmp.lt.s32.totalorder %s29, 1
        %s300 = scalar_select %p299, %s29, 1
        %s301 = smul.addr %s300, 4
        %s302 = scalar_lea.vmem %s1, %s301
        %p303 = pneg %p86
        %p304 = pneg %p83
        %p305 = scmp.lt.s32.totalorder %s29, 1
        %s306 = scalar_select %p305, %s29, 1
        %s307 = smul.addr %s306, 4
        %s308 = scalar_lea.vmem %s2, %s307
        %p309 = pneg %p112
        %p310 = pneg %p109
        %p311 = pneg %p133
        %p312 = pneg %p130
        %p313 = pneg %p154
        %p314 = pneg %p151
        %p315 = pneg %p175
        %p316 = pneg %p172
        %p317 = pneg %p203
        %p318 = pneg %p200
        %s319 = sand.u32 %s190, 1
        %s320 = scalar_lea.sflag [#allocation5], %s319
        %s321 = sand.u32 %s190, 1
        %s322 = smul.addr %s321, 8
        %s323 = scalar_lea.vmem [#allocation4], %s322
        %p324 = pneg %p231
        %p325 = pneg %p228
        %s326 = sand.u32 %s218, 1
        %s327 = scalar_lea.sflag [#allocation7], %s326
        %s328 = sand.u32 %s218, 1
        %s329 = smul.addr %s328, 4
        %s330 = scalar_lea.vmem [#allocation6], %s329
        %p331 = scmp.lt.s32.totalorder %s29, 1
        %s332 = scalar_select %p331, %s29, 1
        %p333 = scmp.lt.s32.totalorder %s30, 0
        %s334 = scalar_select %p333, %s30, 0
        %s335 = sadd.s32 %s334, %s332
        %s336 = smul.addr %s335, 4
        %s337 = scalar_lea.vmem %s0, %s336
        %p338 = scmp.lt.s32.totalorder %s29, 1
        %s339 = scalar_select %p338, %s29, 1
        %s340 = smul.addr %s339, 4
        %s341 = scalar_lea.vmem %s1, %s340
        %p342 = scmp.lt.s32.totalorder %s29, 1
        %s343 = scalar_select %p342, %s29, 1
        %s344 = smul.addr %s343, 4
        %s345 = scalar_lea.vmem %s2, %s344
        %p347 = scmp.eq.s32.totalorder %s30, 0
        // Predicated region
        $region45: #{tpu_custom_call.1} parent=43 // pred_check
          %p348 = pneg %p347
        $region46: #{tpu_custom_call.1} parent=43 // pred_check_branch
          %350 = sbr.rel (%p348) target = $region48
        $region47: #{tpu_custom_call.1} parent=43 // pred_region
          %v351 = vld [vmem:[%s341] sm:$0xf]
          %v352 = vld [vmem:[%s4] sm:$0xf]
          %v353 = vld [vmem:[%s4 + $0x4] sm:$0xf]
          %v354 = vld [vmem:[%s4 + $0x8] sm:$0xf]
          %v355 = vld [vmem:[%s4 + $0xc] sm:$0xf]
          %v360 = vunpack.c.l.b16 %v352
          %v361 = vunpack.c.l.b16 %v353
          %v362 = vunpack.c.l.b16 %v354
          %v363 = vunpack.c.l.b16 %v355
          %v364 = vpack.c.b16 %v361, %v360
          %v365 = vpack.c.b16 %v363, %v362
          %vm368 = vcmask 261120
          %v370 = vsel %vm368, %v351, 0
          %372 = vmatprep.subr.bf16.mxu0 0
          %373 = vmatpush1.bf16.msra.mxu0 0
          %374 = vmatprep.subr.bf16.mxu0 0
          %375 = vmatpush1.bf16.msra.mxu0 0
          %376 = vmatprep.subr.bf16.mxu0 0
          %377 = vmatpush1.bf16.msra.mxu0 0
          %378 = vmatprep.subr.bf16.mxu0 0
          %379 = vmatpush1.bf16.msra.mxu0 0
          %380 = vmatprep.subr.bf16.mxu0 0
          %381 = vmatpush1.bf16.msra.mxu0 0
          %382 = vmatprep.subr.bf16.mxu0 0
          %383 = vmatpush1.bf16.msra.mxu0 0
          %384 = vmatprep.subr.bf16.mxu0 0
          %385 = vmatpush1.bf16.msra.mxu0 %v365
          %386 = vmatprep.subr.bf16.mxu0 0
          %387 = vmatpush1.bf16.msra.mxu0 %v364
          %388 = vmatprep.subr.bf16.mxu0 0
          %389 = vmatpush2.bf16.msra.mxu0 0
          %390 = vmatprep.subr.bf16.mxu0 0
          %391 = vmatpush2.bf16.msra.mxu0 0
          %392 = vmatprep.subr.bf16.mxu0 0
          %393 = vmatpush2.bf16.msra.mxu0 0
          %394 = vmatprep.subr.bf16.mxu0 0
          %395 = vmatpush2.bf16.msra.mxu0 0
          %396 = vmatprep.subr.bf16.mxu0 0
          %397 = vmatpush2.bf16.msra.mxu0 0
          %398 = vmatprep.subr.bf16.mxu0 0
          %399 = vmatpush2.bf16.msra.mxu0 0
          %400 = vmatprep.subr.bf16.mxu0 0
          %401 = vmatpush2.bf16.msra.mxu0 0
          %402 = vmatprep.subr.bf16.mxu0 0
          %403 = vmatpush2.bf16.msra.mxu0 0
          %404 = vmatprep.mubr.bf16.mxu0 0
          %405 = vmatmul.mubr.bf16.gmra.mxu0 %v370
          %v406 = vpop.f32.mrf.mxu0
          %v407 = vadd.f32 0.0, %v406
          %v408 = vpop.f32.mrf.mxu0
          %v409 = vpop.f32.mrf.mxu0
          %v410 = vpop.f32.mrf.mxu0
          %411 = vdwg.mxu0
          %v412 = vpack.c.bf16 %v407, %v407
          %vm413 = vcmask 60416
          %414 = vst.msk [vmem:[#allocation2] sm:$0xf] %vm413, %v412
          %v415 = vld [vmem:[%s345] sm:$0xf]
          %v416 = vld [vmem:[%s5] sm:$0xf]
          %v417 = vld [vmem:[%s5 + $0x4] sm:$0xf]
          %v418 = vld [vmem:[%s5 + $0x8] sm:$0xf]
          %v419 = vld [vmem:[%s5 + $0xc] sm:$0xf]
          %v424 = vunpack.c.l.b16 %v416
          %v425 = vunpack.c.l.b16 %v417
          %v426 = vunpack.c.l.b16 %v418
          %v427 = vunpack.c.l.b16 %v419
          %v428 = vpack.c.b16 %v425, %v424
          %v429 = vpack.c.b16 %v427, %v426
          %v433 = vsel %vm368, %v415, 0
          %435 = vmatprep.subr.bf16.mxu0 0
          %436 = vmatpush1.bf16.msra.mxu0 0
          %437 = vmatprep.subr.bf16.mxu0 0
          %438 = vmatpush1.bf16.msra.mxu0 0
          %439 = vmatprep.subr.bf16.mxu0 0
          %440 = vmatpush1.bf16.msra.mxu0 0
          %441 = vmatprep.subr.bf16.mxu0 0
          %442 = vmatpush1.bf16.msra.mxu0 0
          %443 = vmatprep.subr.bf16.mxu0 0
          %444 = vmatpush1.bf16.msra.mxu0 0
          %445 = vmatprep.subr.bf16.mxu0 0
          %446 = vmatpush1.bf16.msra.mxu0 0
          %447 = vmatprep.subr.bf16.mxu0 0
          %448 = vmatpush1.bf16.msra.mxu0 %v429
          %449 = vmatprep.subr.bf16.mxu0 0
          %450 = vmatpush1.bf16.msra.mxu0 %v428
          %451 = vmatprep.subr.bf16.mxu0 0
          %452 = vmatpush2.bf16.msra.mxu0 0
          %453 = vmatprep.subr.bf16.mxu0 0
          %454 = vmatpush2.bf16.msra.mxu0 0
          %455 = vmatprep.subr.bf16.mxu0 0
          %456 = vmatpush2.bf16.msra.mxu0 0
          %457 = vmatprep.subr.bf16.mxu0 0
          %458 = vmatpush2.bf16.msra.mxu0 0
          %459 = vmatprep.subr.bf16.mxu0 0
          %460 = vmatpush2.bf16.msra.mxu0 0
          %461 = vmatprep.subr.bf16.mxu0 0
          %462 = vmatpush2.bf16.msra.mxu0 0
          %463 = vmatprep.subr.bf16.mxu0 0
          %464 = vmatpush2.bf16.msra.mxu0 0
          %465 = vmatprep.subr.bf16.mxu0 0
          %466 = vmatpush2.bf16.msra.mxu0 0
          %467 = vmatprep.mubr.bf16.mxu0 0
          %468 = vmatmul.mubr.bf16.gmra.mxu0 %v433
          %v469 = vpop.f32.mrf.mxu0
          %v470 = vadd.f32 0.0, %v469
          %v471 = vpop.f32.mrf.mxu0
          %v472 = vpop.f32.mrf.mxu0
          %v473 = vpop.f32.mrf.mxu0
          %474 = vdwg.mxu0
          %v475 = vpack.c.bf16 %v470, %v470
          %476 = vst.msk [vmem:[#allocation3] sm:$0xf] %vm413, %v475
        $region48: #{tpu_custom_call.1} parent=43 // pred_fallthru
          _
        %v477 = vld [vmem:[%s337] sm:$0xf]
        %v478 = vld [vmem:[%s3] sm:$0xf]
        %v479 = vld [vmem:[%s3 + $0x4] sm:$0xf]
        %v480 = vld [vmem:[%s3 + $0x8] sm:$0xf]
        %v481 = vld [vmem:[%s3 + $0xc] sm:$0xf]
        %v486 = vunpack.c.l.b16 %v478
        %v487 = vunpack.c.l.b16 %v479
        %v488 = vunpack.c.l.b16 %v480
        %v489 = vunpack.c.l.b16 %v481
        %v490 = vpack.c.b16 %v487, %v486
        %v491 = vpack.c.b16 %v489, %v488
        %vm494 = vcmask 261120
        %v496 = vsel %vm494, %v477, 0
        %498 = vmatprep.subr.bf16.mxu0 0
        %499 = vmatpush1.bf16.msra.mxu0 0
        %500 = vmatprep.subr.bf16.mxu0 0
        %501 = vmatpush1.bf16.msra.mxu0 0
        %502 = vmatprep.subr.bf16.mxu0 0
        %503 = vmatpush1.bf16.msra.mxu0 0
        %504 = vmatprep.subr.bf16.mxu0 0
        %505 = vmatpush1.bf16.msra.mxu0 0
        %506 = vmatprep.subr.bf16.mxu0 0
        %507 = vmatpush1.bf16.msra.mxu0 0
        %508 = vmatprep.subr.bf16.mxu0 0
        %509 = vmatpush1.bf16.msra.mxu0 0
        %510 = vmatprep.subr.bf16.mxu0 0
        %511 = vmatpush1.bf16.msra.mxu0 %v491
        %512 = vmatprep.subr.bf16.mxu0 0
        %513 = vmatpush1.bf16.msra.mxu0 %v490
        %514 = vmatprep.subr.bf16.mxu0 0
        %515 = vmatpush2.bf16.msra.mxu0 0
        %516 = vmatprep.subr.bf16.mxu0 0
        %517 = vmatpush2.bf16.msra.mxu0 0
        %518 = vmatprep.subr.bf16.mxu0 0
        %519 = vmatpush2.bf16.msra.mxu0 0
        %520 = vmatprep.subr.bf16.mxu0 0
        %521 = vmatpush2.bf16.msra.mxu0 0
        %522 = vmatprep.subr.bf16.mxu0 0
        %523 = vmatpush2.bf16.msra.mxu0 0
        %524 = vmatprep.subr.bf16.mxu0 0
        %525 = vmatpush2.bf16.msra.mxu0 0
        %526 = vmatprep.subr.bf16.mxu0 0
        %527 = vmatpush2.bf16.msra.mxu0 0
        %528 = vmatprep.subr.bf16.mxu0 0
        %529 = vmatpush2.bf16.msra.mxu0 0
        %530 = vmatprep.mubr.bf16.mxu0 0
        %531 = vmatmul.mubr.bf16.gmra.mxu0 %v496
        %v532 = vpop.f32.mrf.mxu0
        %v533 = vadd.f32 0.0, %v532
        %v534 = vpop.f32.mrf.mxu0
        %v535 = vpop.f32.mrf.mxu0
        %v536 = vpop.f32.mrf.mxu0
        %537 = vdwg.mxu0
        %v538 = vpack.c.bf16 %v533, %v533
        %v539 = vld [vmem:[#allocation2] sm:$0xf]
        %vm540 = vcmask 64512
        %v542 = vsel %vm540, %v538, 0
        %v545 = vsel %vm540, %v539, 0
        %547 = vmatprep.subr.bf16.mxu0 0
        %548 = vmatpush1.bf16.xpose.msra.mxu0 0
        %549 = vmatprep.subr.bf16.mxu0 0
        %550 = vmatpush1.bf16.xpose.msra.mxu0 0
        %551 = vmatprep.subr.bf16.mxu0 0
        %552 = vmatpush1.bf16.xpose.msra.mxu0 0
        %553 = vmatprep.subr.bf16.mxu0 0
        %554 = vmatpush1.bf16.xpose.msra.mxu0 0
        %555 = vmatprep.subr.bf16.mxu0 0
        %556 = vmatpush1.bf16.xpose.msra.mxu0 0
        %557 = vmatprep.subr.bf16.mxu0 0
        %558 = vmatpush1.bf16.xpose.msra.mxu0 0
        %559 = vmatprep.subr.bf16.mxu0 0
        %560 = vmatpush1.bf16.xpose.msra.mxu0 0
        %561 = vmatprep.subr.bf16.mxu0 0
        %562 = vmatpush1.bf16.xpose.msra.mxu0 %v545
        %563 = vmatprep.subr.bf16.mxu0 0
        %564 = vmatpush2.bf16.xpose.msra.mxu0 0
        %565 = vmatprep.subr.bf16.mxu0 0
        %566 = vmatpush2.bf16.xpose.msra.mxu0 0
        %567 = vmatprep.subr.bf16.mxu0 0
        %568 = vmatpush2.bf16.xpose.msra.mxu0 0
        %569 = vmatprep.subr.bf16.mxu0 0
        %570 = vmatpush2.bf16.xpose.msra.mxu0 0
        %571 = vmatprep.subr.bf16.mxu0 0
        %572 = vmatpush2.bf16.xpose.msra.mxu0 0
        %573 = vmatprep.subr.bf16.mxu0 0
        %574 = vmatpush2.bf16.xpose.msra.mxu0 0
        %575 = vmatprep.subr.bf16.mxu0 0
        %576 = vmatpush2.bf16.xpose.msra.mxu0 0
        %577 = vmatprep.subr.bf16.mxu0 0
        %578 = vmatpush2.bf16.xpose.msra.mxu0 0
        %579 = vmatprep.mubr.bf16.mxu0 0
        %580 = vmatmul.mubr.bf16.gmra.mxu0 %v542
        %v581 = vpop.f32.mrf.mxu0
        %v582 = vadd.f32 0.0, %v581
        %v583 = vpop.f32.mrf.mxu0
        %v584 = vpop.f32.mrf.mxu0
        %v585 = vpop.f32.mrf.mxu0
        %586 = vdwg.mxu0
        %v587 = vsel %vm540, %v582, -inf
        %588 = vmax.xlane.f32.xlu0 %v587
        %v589 = vpop.xlane.xlu0 %588
        %v590 = vsub.f32 %v582, %v589
        %v591 = vmul.f32 %v590, 1.442695
        %v592 = vpow.pop %v591
        %v593 = vsel %vm540, %v592, 0.0
        %594 = vadd.xlane.f32.xlu0 %v593
        %v595 = vpop.xlane.xlu0 %594
        %v596 = vrcp.pop %v595
        %v597 = vmul.f32 %v592, %v596
        %v598 = vpack.c.bf16 %v597, %v597
        %vm599 = vcmask 60416
        %600 = vst.msk [vmem:[%s330] sm:$0xf] %vm599, %v598
        %v601 = vld [vmem:[#allocation3] sm:$0xf]
        %v603 = vsel %vm540, %v598, 0
        %vm605 = vcmask 1043456
        %v607 = vsel %vm605, %v601, 0
        %609 = vmatprep.subr.bf16.mxu0 0
        %610 = vmatpush1.bf16.msra.mxu0 0
        %611 = vmatprep.subr.bf16.mxu0 0
        %612 = vmatpush1.bf16.msra.mxu0 0
        %613 = vmatprep.subr.bf16.mxu0 0
        %614 = vmatpush1.bf16.msra.mxu0 0
        %615 = vmatprep.subr.bf16.mxu0 0
        %616 = vmatpush1.bf16.msra.mxu0 0
        %617 = vmatprep.subr.bf16.mxu0 0
        %618 = vmatpush1.bf16.msra.mxu0 0
        %619 = vmatprep.subr.bf16.mxu0 0
        %620 = vmatpush1.bf16.msra.mxu0 0
        %621 = vmatprep.subr.bf16.mxu0 0
        %622 = vmatpush1.bf16.msra.mxu0 0
        %623 = vmatprep.subr.bf16.mxu0 0
        %624 = vmatpush1.bf16.msra.mxu0 %v607
        %625 = vmatprep.subr.bf16.mxu0 0
        %626 = vmatpush2.bf16.msra.mxu0 0
        %627 = vmatprep.subr.bf16.mxu0 0
        %628 = vmatpush2.bf16.msra.mxu0 0
        %629 = vmatprep.subr.bf16.mxu0 0
        %630 = vmatpush2.bf16.msra.mxu0 0
        %631 = vmatprep.subr.bf16.mxu0 0
        %632 = vmatpush2.bf16.msra.mxu0 0
        %633 = vmatprep.subr.bf16.mxu0 0
        %634 = vmatpush2.bf16.msra.mxu0 0
        %635 = vmatprep.subr.bf16.mxu0 0
        %636 = vmatpush2.bf16.msra.mxu0 0
        %637 = vmatprep.subr.bf16.mxu0 0
        %638 = vmatpush2.bf16.msra.mxu0 0
        %639 = vmatprep.subr.bf16.mxu0 0
        %640 = vmatpush2.bf16.msra.mxu0 0
        %641 = vmatprep.mubr.bf16.mxu0 0
        %642 = vmatmul.mubr.bf16.gmra.mxu0 %v603
        %v643 = vpop.f32.mrf.mxu0
        %v644 = vadd.f32 0.0, %v643
        %v645 = vpop.f32.mrf.mxu0
        %v646 = vpop.f32.mrf.mxu0
        %v647 = vpop.f32.mrf.mxu0
        %648 = vdwg.mxu0
        %649 = vst.msk [vmem:[%s323] sm:$0xff] %vm540, %v644
        %s650 = sand.u32 %s190, 1
        %s651 = scalar_lea.sflag [#allocation5], %s650
        %s652 = sand.u32 %s190, 1
        %s653 = smul.addr %s652, 8
        %s654 = scalar_lea.vmem [#allocation4], %s653
        %s655 = sand.u32 %s218, 1
        %s656 = scalar_lea.sflag [#allocation7], %s655
        %s657 = sand.u32 %s218, 1
        %s658 = smul.addr %s657, 4
        %s659 = scalar_lea.vmem [#allocation6], %s658
        // Predicated region
        $region49: #{tpu_custom_call.1} parent=43 // pred_check
          %p660 = pneg %p200
        $region50: #{tpu_custom_call.1} parent=43 // pred_check_branch
          %662 = sbr.rel (%p660) target = $region52
        $region51: #{tpu_custom_call.1} parent=43 // pred_region
          %s664 = ssub.s32 128, 128
          %665 = vsyncadd %s651, %s664
          %s666 = sadd.s32 %s30, %s29
          %s667 = smul.addr %s666, 128
          %s668 = scalar_lea.hbm %s6, %s667
          %s670 = sshll.u32 %s654, 4
          %s671 = int_to_ptr.vmem [resolvable:$true] %s670
          %673 = dma.vmem_to_hbm [thread:$0]  %s671, 128, %s668, %s651
        $region52: #{tpu_custom_call.1} parent=43 // pred_fallthru
          _
        // Predicated region
        $region53: #{tpu_custom_call.1} parent=43 // pred_check
          %p674 = pneg %p228
        $region54: #{tpu_custom_call.1} parent=43 // pred_check_branch
          %676 = sbr.rel (%p674) target = $region56
        $region55: #{tpu_custom_call.1} parent=43 // pred_region
          %s678 = ssub.s32 64, 64
          %679 = vsyncadd %s656, %s678
          %s680 = sadd.s32 %s30, %s29
          %s681 = smul.addr %s680, 64
          %s682 = scalar_lea.hbm %s7, %s681
          %s684 = sshll.u32 %s659, 4
          %s685 = int_to_ptr.vmem [resolvable:$true] %s684
          %687 = dma.vmem_to_hbm [thread:$0]  %s685, 64, %s682, %s656
        $region56: #{tpu_custom_call.1} parent=43 // pred_fallthru
          _
      $region44: #{tpu_custom_call.1} parent=5 // pred_fallthru
        _
      %p688 = scmp.le.s32.totalorder 2, %s20
      // Predicated region
      $region57: #{tpu_custom_call.1} parent=5 // pred_check
        %p689 = pneg %p688
      $region58: #{tpu_custom_call.1} parent=5 // pred_check_branch
        %691 = sbr.rel (%p689) target = $region60
      $region59: #{tpu_custom_call.1} parent=5 // pred_region
        %s692 = ssub.s32 %s20, 2
        // Predicated region
        $region61: #{tpu_custom_call.1} parent=59 // pred_check
          %p693 = pneg %p206
        $region62: #{tpu_custom_call.1} parent=59 // pred_check_branch
          %695 = sbr.rel (%p693) target = $region64
        $region63: #{tpu_custom_call.1} parent=59 // pred_region
          %s696 = sand.u32 %s191, 1
          %s697 = scalar_lea.sflag [#allocation5], %s696
          %s698 = sand.u32 %s191, 1
          %s699 = smul.addr %s698, 8
          %s700 = scalar_lea.vmem [#allocation4], %s699
          %701 = dma.done %s697, 128
        $region64: #{tpu_custom_call.1} parent=59 // pred_fallthru
          _
        // Predicated region
        $region65: #{tpu_custom_call.1} parent=59 // pred_check
          %p702 = pneg %p234
        $region66: #{tpu_custom_call.1} parent=59 // pred_check_branch
          %704 = sbr.rel (%p702) target = $region68
        $region67: #{tpu_custom_call.1} parent=59 // pred_region
          %s705 = sand.u32 %s219, 1
          %s706 = scalar_lea.sflag [#allocation7], %s705
          %s707 = sand.u32 %s219, 1
          %s708 = smul.addr %s707, 4
          %s709 = scalar_lea.vmem [#allocation6], %s708
          %710 = dma.done %s706, 64
        $region68: #{tpu_custom_call.1} parent=59 // pred_fallthru
          _
      $region60: #{tpu_custom_call.1} parent=5 // pred_fallthru
        _
    $region6: #{tpu_custom_call.1} parent=1 // loop_footer
      %s24 = sadd.s32 1, %s20
    $region7: #{tpu_custom_call.1} parent=1 // loop_footer_branch
      %19 = sbr.rel target = $region3
    $region8: #{tpu_custom_call.1} parent=1 // loop_exit
      _
    %711 = vsyncpa [#allocation5], 1
    %s712 = scalar_lea.sflag [#allocation5], 1
    %713 = vsyncpa %s712, 1
    %714 = vsyncpa [#allocation7], 1
    %s715 = scalar_lea.sflag [#allocation7], 1
    %716 = vsyncpa %s715, 1

</llo_original>
